<compile_context>
chip_gen: v7x
topology: tpu7x:2x2x1
jax: 0.10.0
libtpu: 0.0.40
codegen_flags: <defaults>
</compile_context>

<pallas_src>
import numpy as np
import jax
import jax.numpy as jnp
from jax.experimental import pallas as pl
from jax.experimental.pallas import tpu as pltpu


def _round_up(x, m):
    return (x + m - 1) // m * m


def _flat_rfft2_matrix(H, W):
    """Flattened rfft2 operator, lane-padded, real/imag packed side-by-side.

    For d of shape (H, W) flattened row-major to (H*W,):
        rfft2(d).flatten() == d_flat @ (Mr + i*Mi)   (first H*(W//2+1) columns)
    Columns beyond H*Wh are zero, so they add sqrt(0)=0 to the magnitude sum.
    Returns M = concat([Mr, Mi], axis=1) of shape (H*W, 2*Kp) and Kp.
    """
    Wh = W // 2 + 1
    K = H * Wh
    Kp = _round_up(K, 128)

    ph = -2.0 * np.pi * np.outer(np.arange(H), np.arange(H)) / H    # (h, k1)
    pw = -2.0 * np.pi * np.outer(np.arange(W), np.arange(Wh)) / W   # (w, k2)
    ang = ph[:, None, :, None] + pw[None, :, None, :]               # (H, W, H, Wh)
    ang = ang.reshape(H * W, K)

    M = np.zeros((H * W, 2 * Kp), np.float32)
    M[:, :K] = np.cos(ang)
    M[:, Kp:Kp + K] = np.sin(ang)
    return jnp.asarray(M), Kp


def _l1_freq_kernel(pred_ref, targ_ref, m_ref, spat_ref, freq_ref):
    # (TB, H*W) block; cast in-kernel so bf16/f16 inputs stay narrow over HBM.
    d = pred_ref[...].astype(jnp.float32) - targ_ref[...].astype(jnp.float32)

    # spatial L1 partial sum for this block
    spat = jnp.sum(jnp.abs(d))

    # flattened rfft2 via ONE MXU matmul: (TB, HW) @ (HW, 2*Kp)
    x = jnp.dot(d, m_ref[...], preferred_element_type=jnp.float32)
    kp = m_ref.shape[1] // 2          # static; Kp is a multiple of 128
    xr = x[:, :kp]                    # lane-tile-aligned slices (no relayout)
    xi = x[:, kp:]
    freq = jnp.sum(jnp.sqrt(xr * xr + xi * xi))

    # lane-dense per-block partial outputs (scalar broadcast into an (8,128) tile)
    spat_ref[...] = jnp.full(spat_ref.shape, spat, jnp.float32)
    freq_ref[...] = jnp.full(freq_ref.shape, freq, jnp.float32)


def l1_freq_loss(pred, target, loss_weight=0.01):
    """Equivalent of L1FreqLoss(loss_weight, reduction='mean').forward."""
    N, C, H, W = pred.shape
    assert target.shape == pred.shape
    B = N * C
    Wh = W // 2 + 1
    HW = H * W

    M, Kp = _flat_rfft2_matrix(H, W)

    # Flattened-operator path only while the DFT matrix fits comfortably in VMEM.
    mat_bytes = HW * 2 * Kp * 4
    assert mat_bytes <= (16 << 20), "flattened DFT operator too large for VMEM"
    # TODO(synk): separable F_H @ d @ R_W^T path for large H, W.

    # Keep native dtype through the DMA (kernel is HBM-bandwidth bound).
    p = pred.reshape(B, HW)
    t = target.reshape(B, HW)

    itemsize = jnp.dtype(p.dtype).itemsize
    tb_cap = max(1, (2 << 20) // (HW * itemsize))   # <= 2 MiB per input block
    TB = min(B, tb_cap)
    if TB < B:
        TB = max(8, (TB // 8) * 8)                  # sublane-aligned when tiling B
    num_blocks = -(-B // TB)
    B_pad = num_blocks * TB
    if B_pad != B:
        # zero-padded images give zero diff -> contribute 0 to both sums
        p = jnp.pad(p, ((0, B_pad - B), (0, 0)))
        t = jnp.pad(t, ((0, B_pad - B), (0, 0)))

    spat_part, freq_part = pl.pallas_call(
        _l1_freq_kernel,
        out_shape=(
            jax.ShapeDtypeStruct((num_blocks, 8, 128), jnp.float32),
            jax.ShapeDtypeStruct((num_blocks, 8, 128), jnp.float32),
        ),
        grid_spec=pltpu.PrefetchScalarGridSpec(
            num_scalar_prefetch=0,
            grid=(num_blocks,),
            in_specs=[
                pl.BlockSpec((TB, HW), lambda g: (g, 0)),       # pred block
                pl.BlockSpec((TB, HW), lambda g: (g, 0)),       # target block
                pl.BlockSpec((HW, 2 * Kp), lambda g: (0, 0)),   # [Mr|Mi] (resident)
            ],
            out_specs=[
                pl.BlockSpec((1, 8, 128), lambda g: (g, 0, 0)),
                pl.BlockSpec((1, 8, 128), lambda g: (g, 0, 0)),
            ],
        ),
        compiler_params=pltpu.CompilerParams(
            dimension_semantics=("parallel",),
            vmem_limit_bytes=64 << 20),
    )(p, t, M)

    lw = jnp.float32(loss_weight)
    spat_sum = jnp.sum(spat_part[:, 0, 0])
    freq_sum = jnp.sum(freq_part[:, 0, 0])
    freq_mean = freq_sum / jnp.float32(B * H * Wh)   # mean over complex rfft2 bins
    spat_mean = spat_sum / jnp.float32(B * HW)       # mean over spatial elements
    # total = loss_weight * freq_mean + loss_weight * spatial_mean
    # (inner L1Loss is constructed with the same loss_weight, reduction='mean')
    return lw * freq_mean + lw * spat_mean


def _reference(pred, target, loss_weight=0.01):
    pred = pred.astype(jnp.float32)
    target = target.astype(jnp.float32)
    diff = jnp.fft.rfft2(pred) - jnp.fft.rfft2(target)
    freq = jnp.mean(jnp.abs(diff))
    spatial = loss_weight * jnp.mean(jnp.abs(pred - target))  # inner L1Loss(mean)
    return loss_weight * freq + spatial


if __name__ == "__main__":
    key = jax.random.PRNGKey(0)
    k1, k2 = jax.random.split(key)
    N, C, H, W = 2, 4, 16, 16
    pred = jax.random.normal(k1, (N, C, H, W), dtype=jnp.float32)
    target = jax.random.normal(k2, (N, C, H, W), dtype=jnp.float32)

    fn = jax.jit(lambda p, t: l1_freq_loss(p, t, loss_weight=0.01))
    out = jax.block_until_ready(fn(pred, target))

    ref = jax.block_until_ready(_reference(pred, target, loss_weight=0.01))
    np.testing.assert_allclose(np.asarray(out), np.asarray(ref), rtol=5e-4, atol=5e-5)
    print("KERNEL_OK")
</pallas_src>

<mosaic_0001>
module attributes {stable_mosaic.version = 11 : i64} {
  func.func @_l1_freq_kernel(%arg0: i32, %arg1: memref<8x256xf32, #tpu.memory_space<vmem>>, %arg2: memref<8x256xf32, #tpu.memory_space<vmem>>, %arg3: memref<256x512xf32, #tpu.memory_space<vmem>>, %arg4: memref<1x8x128xf32, #tpu.memory_space<vmem>>, %arg5: memref<1x8x128xf32, #tpu.memory_space<vmem>>) attributes {dimension_semantics = [#tpu.dimension_semantics<parallel>], iteration_bounds = array<i64: 1>, scalar_prefetch = 0 : i64, scratch_operands = 0 : i64, tpu.core_type = #tpu.core_type<tc>, window_params = [{transform_indices = @transform_0, window_bounds = array<i64: 8, 256>}, {transform_indices = @transform_1, window_bounds = array<i64: 8, 256>}, {pipeline_mode = #tpu.pipeline_mode<synchronous>, transform_indices = @transform_2, window_bounds = array<i64: 256, 512>}, {transform_indices = @transform_3, window_bounds = array<i64: 1, 8, 128>}, {transform_indices = @transform_4, window_bounds = array<i64: 1, 8, 128>}]} {
    %c0 = arith.constant 0 : index
    %c0_0 = arith.constant 0 : index
    %0 = vector.load %arg1[%c0, %c0_0] : memref<8x256xf32, #tpu.memory_space<vmem>>, vector<8x256xf32>
    %c0_1 = arith.constant 0 : index
    %c0_2 = arith.constant 0 : index
    %1 = vector.load %arg2[%c0_1, %c0_2] : memref<8x256xf32, #tpu.memory_space<vmem>>, vector<8x256xf32>
    %2 = arith.subf %0, %1 : vector<8x256xf32>
    %3 = math.absf %2 : vector<8x256xf32>
    %4 = vector.shape_cast %3 : vector<8x256xf32> to vector<1x8x256xf32>
    %cst = arith.constant dense<0.000000e+00> : vector<1xf32>
    %5 = vector.multi_reduction <add>, %4, %cst [1, 2] : vector<1x8x256xf32> to vector<1xf32>
    %6 = vector.shape_cast %5 : vector<1xf32> to vector<1x1x1xf32>
    %7 = vector.extract %6[0, 0, 0] : f32 from vector<1x1x1xf32>
    %c0_3 = arith.constant 0 : index
    %c0_4 = arith.constant 0 : index
    %8 = vector.load %arg3[%c0_3, %c0_4] : memref<256x512xf32, #tpu.memory_space<vmem>>, vector<256x512xf32>
    %cst_5 = arith.constant dense<0.000000e+00> : vector<8x512xf32>
    %9 = tpu.matmul %2, %8, %cst_5 {dimension_numbers = #tpu.dot_dimension_numbers<[1], [0], [0], [1], [0, 0, 1, 1], [], []>} : vector<8x256xf32>, vector<256x512xf32>, vector<8x512xf32> -> vector<8x512xf32>
    %10 = vector.extract_strided_slice %9 {offsets = [0, 0], sizes = [8, 256], strides = [1, 1]} : vector<8x512xf32> to vector<8x256xf32>
    %11 = vector.extract_strided_slice %9 {offsets = [0, 256], sizes = [8, 256], strides = [1, 1]} : vector<8x512xf32> to vector<8x256xf32>
    %12 = arith.mulf %10, %10 : vector<8x256xf32>
    %13 = arith.mulf %11, %11 : vector<8x256xf32>
    %14 = arith.addf %12, %13 : vector<8x256xf32>
    %15 = math.sqrt %14 : vector<8x256xf32>
    %16 = vector.shape_cast %15 : vector<8x256xf32> to vector<1x8x256xf32>
    %cst_6 = arith.constant dense<0.000000e+00> : vector<1xf32>
    %17 = vector.multi_reduction <add>, %16, %cst_6 [1, 2] : vector<1x8x256xf32> to vector<1xf32>
    %18 = vector.shape_cast %17 : vector<1xf32> to vector<1x1x1xf32>
    %19 = vector.extract %18[0, 0, 0] : f32 from vector<1x1x1xf32>
    %20 = vector.broadcast %7 : f32 to vector<1x8x128xf32>
    %c0_7 = arith.constant 0 : index
    %c0_8 = arith.constant 0 : index
    %c0_9 = arith.constant 0 : index
    %21 = vector.load %arg4[%c0_7, %c0_8, %c0_9] : memref<1x8x128xf32, #tpu.memory_space<vmem>>, vector<1x8x128xf32>
    tpu.vector_store %arg4[%c0_7, %c0_8, %c0_9], %20 {strides = array<i32>} : memref<1x8x128xf32, #tpu.memory_space<vmem>>, vector<1x8x128xf32>,
    %22 = vector.broadcast %19 : f32 to vector<1x8x128xf32>
    %c0_10 = arith.constant 0 : index
    %c0_11 = arith.constant 0 : index
    %c0_12 = arith.constant 0 : index
    %23 = vector.load %arg5[%c0_10, %c0_11, %c0_12] : memref<1x8x128xf32, #tpu.memory_space<vmem>>, vector<1x8x128xf32>
    tpu.vector_store %arg5[%c0_10, %c0_11, %c0_12], %22 {strides = array<i32>} : memref<1x8x128xf32, #tpu.memory_space<vmem>>, vector<1x8x128xf32>,
    return
  }
  func.func @transform_0(%arg0: i32) -> (i32, i32) {
    %c0_i32 = arith.constant 0 : i32
    %c0_i32_0 = arith.constant 0 : i32
    return %arg0, %c0_i32 : i32, i32
  }
  func.func @transform_1(%arg0: i32) -> (i32, i32) {
    %c0_i32 = arith.constant 0 : i32
    %c0_i32_0 = arith.constant 0 : i32
    return %arg0, %c0_i32 : i32, i32
  }
  func.func @transform_2(%arg0: i32) -> (i32, i32) {
    %c0_i32 = arith.constant 0 : i32
    %c0_i32_0 = arith.constant 0 : i32
    %c0_i32_1 = arith.constant 0 : i32
    return %c0_i32, %c0_i32_0 : i32, i32
  }
  func.func @transform_3(%arg0: i32) -> (i32, i32, i32) {
    %c0_i32 = arith.constant 0 : i32
    %c0_i32_0 = arith.constant 0 : i32
    %c0_i32_1 = arith.constant 0 : i32
    return %arg0, %c0_i32, %c0_i32_0 : i32, i32, i32
  }
  func.func @transform_4(%arg0: i32) -> (i32, i32, i32) {
    %c0_i32 = arith.constant 0 : i32
    %c0_i32_0 = arith.constant 0 : i32
    %c0_i32_1 = arith.constant 0 : i32
    return %arg0, %c0_i32, %c0_i32_0 : i32, i32, i32
  }
}

</mosaic_0001>

<llo_original>
// kernel: _lambda_.1
$region0: #{_lambda_.1}
  #allocation0 [shape = 'u32[]', space=smem, size = 0x4, offset = 0x4, fixed_abs, tag = 'smem constant byte address 0x4 - core index']
  #allocation1 [shape = 'u32[144,128]{1,0:T(1,128)}', space=vmem, size = 0x12000, scoped, tag = 'internal scratch']
  %s0 = inlined_call_operand.hbm [shape: f32[8,256], index: 0, kind: input, shape index: {}]
  %s1 = inlined_call_operand.hbm [shape: f32[8,256], index: 1, kind: input, shape index: {}]
  %s2 = inlined_call_operand.hbm [shape: f32[256,512], index: 2, kind: input, shape index: {}]
  %s3 = inlined_call_operand.hbm [shape: f32[1,8,128], index: 3, kind: output, shape index: {0}]
  %s4 = inlined_call_operand.hbm [shape: f32[1,8,128], index: 4, kind: output, shape index: {1}]
  %5 = xla_tuple %s3, %s4
  %s6 = sld [smem:[#allocation0]]
  $region42: #{_lambda_.1} parent=0
    _
  %s8 = ssub.s32 1, %s6
  %s9 = scalar_select 0, %s8, %s6
  $region1: #{_lambda_.1} parent=0
    #allocation2 [shape = 'u8[8192]{0}', space=vmem, size = 0x2000, scoped, tag = 'input window, operand 0, single buffered']
    #allocation3 [shape = 's32[1]{0}', space=sflag, size = 0x4, scoped, tag = 'scoped memory for _lambda_.1']
    #allocation4 [shape = 's32[1]{0}', space=sflag, size = 0x4, scoped, tag = 'scoped memory for _lambda_.1']
    #allocation5 [shape = 'u8[8192]{0}', space=vmem, size = 0x2000, scoped, tag = 'input window, operand 1, single buffered']
    #allocation6 [shape = 's32[1]{0}', space=sflag, size = 0x4, scoped, tag = 'scoped memory for _lambda_.1']
    #allocation7 [shape = 'u8[524288]{0}', space=vmem, size = 0x80000, scoped, tag = 'input window, operand 2, single buffered']
    #allocation8 [shape = 'u8[4096]{0}', space=vmem, size = 0x1000, scoped, tag = 'output window, operand 0, single buffered']
    #allocation9 [shape = 'u8[4096]{0}', space=vmem, size = 0x1000, scoped, tag = 'output window, operand 1, single buffered']
    #allocation10 [shape = 's32[1]{0}', space=sflag, size = 0x4, scoped, tag = 'scoped memory for _lambda_.1']
    %10 = vsyncpa [#allocation3], 0
    %11 = vsyncpa [#allocation6], 0
    %12 = vsyncpa [#allocation4], 0
    %13 = vsyncpa [#allocation10], 0
    // Predicated region
    $region2: #{_lambda_.1} parent=1 // pred_check
      _
    $region3: #{_lambda_.1} parent=1 // pred_check_branch
      %15 = sbr.rel (0) target = $region5
    $region4: #{_lambda_.1} parent=1 // pred_region
      %s17 = ssub.s32 256, 256
      %18 = vsyncadd [#allocation3], %s17
      %s20 = sshll.u32 [#allocation2], 4
      %s21 = int_to_ptr.vmem [resolvable:$true] %s20
      %23 = dma.hbm_to_vmem [thread:$0]  %s0, 256, %s21, [#allocation3]
    $region5: #{_lambda_.1} parent=1 // pred_fallthru
      _
    // Predicated region
    $region6: #{_lambda_.1} parent=1 // pred_check
      _
    $region7: #{_lambda_.1} parent=1 // pred_check_branch
      %25 = sbr.rel (0) target = $region9
    $region8: #{_lambda_.1} parent=1 // pred_region
      %s27 = ssub.s32 256, 256
      %28 = vsyncadd [#allocation6], %s27
      %s30 = sshll.u32 [#allocation5], 4
      %s31 = int_to_ptr.vmem [resolvable:$true] %s30
      %33 = dma.hbm_to_vmem [thread:$0]  %s1, 256, %s31, [#allocation6]
    $region9: #{_lambda_.1} parent=1 // pred_fallthru
      _
    // Predicated region
    $region10: #{_lambda_.1} parent=1 // pred_check
      _
    $region11: #{_lambda_.1} parent=1 // pred_check_branch
      %35 = sbr.rel (0) target = $region13
    $region12: #{_lambda_.1} parent=1 // pred_region
      %s37 = ssub.s32 16384, 16384
      %38 = vsyncadd [#allocation6], %s37
      %s39 = sshll.u32 [#allocation7], 4
      %s40 = int_to_ptr.vmem [resolvable:$true] %s39
      %45 = dma.hbm_to_vmem [thread:$0]  %s2, 16384, %s40, [#allocation6], 512, 512, 32
    $region13: #{_lambda_.1} parent=1 // pred_fallthru
      _
    // Predicated region
    $region14: #{_lambda_.1} parent=1 // pred_check
      _
    $region15: #{_lambda_.1} parent=1 // pred_check_branch
      %47 = sbr.rel (0) target = $region17
    $region16: #{_lambda_.1} parent=1 // pred_region
      %48 = dma.done [#allocation3], 256
    $region17: #{_lambda_.1} parent=1 // pred_fallthru
      _
    // Predicated region
    $region18: #{_lambda_.1} parent=1 // pred_check
      _
    $region19: #{_lambda_.1} parent=1 // pred_check_branch
      %50 = sbr.rel (0) target = $region21
    $region20: #{_lambda_.1} parent=1 // pred_region
      %51 = dma.done [#allocation6], 256
    $region21: #{_lambda_.1} parent=1 // pred_fallthru
      _
    // Predicated region
    $region22: #{_lambda_.1} parent=1 // pred_check
      _
    $region23: #{_lambda_.1} parent=1 // pred_check_branch
      %53 = sbr.rel (0) target = $region25
    $region24: #{_lambda_.1} parent=1 // pred_region
      %54 = dma.done [#allocation6], 16384
    $region25: #{_lambda_.1} parent=1 // pred_fallthru
      _
    %v55 = vld [vmem:[#allocation2] sm:$0xff]
    %v56 = vld [vmem:[#allocation2 + $0x8] sm:$0xff]
    %v57 = vld [vmem:[#allocation5] sm:$0xff]
    %v58 = vld [vmem:[#allocation5 + $0x8] sm:$0xff]
    %v59 = vsub.f32 %v55, %v57
    %v60 = vsub.f32 %v56, %v58
    %v61 = vand.u32 2147483647, %v59
    %v62 = vand.u32 2147483647, %v60
    %v63 = vadd.f32 %v61, %v62
    %64 = vadd.xlane.f32.xlu0 %v63
    %v65 = vpop.xlane.xlu0 %64
    %v66 = vrot.slane %v65, 4
    %v67 = vadd.f32 %v65, %v66
    %v68 = vrot.slane %v67, 2
    %v69 = vadd.f32 %v67, %v68
    %v70 = vrot.slane %v69, 1
    %v71 = vadd.f32 %v69, %v70
    %s72 = vtos %v71
    %v73 = vld [vmem:[#allocation7] sm:$0xff]
    %v74 = vld [vmem:[#allocation7 + $0x8] sm:$0xff]
    %v75 = vld [vmem:[#allocation7 + $0x10] sm:$0xff]
    %v76 = vld [vmem:[#allocation7 + $0x18] sm:$0xff]
    %v77 = vld [vmem:[#allocation7 + $0x20] sm:$0xff]
    %v78 = vld [vmem:[#allocation7 + $0x28] sm:$0xff]
    %v79 = vld [vmem:[#allocation7 + $0x30] sm:$0xff]
    %v80 = vld [vmem:[#allocation7 + $0x38] sm:$0xff]
    %v81 = vld [vmem:[#allocation7 + $0x40] sm:$0xff]
    %v82 = vld [vmem:[#allocation7 + $0x48] sm:$0xff]
    %v83 = vld [vmem:[#allocation7 + $0x50] sm:$0xff]
    %v84 = vld [vmem:[#allocation7 + $0x58] sm:$0xff]
    %v85 = vld [vmem:[#allocation7 + $0x60] sm:$0xff]
    %v86 = vld [vmem:[#allocation7 + $0x68] sm:$0xff]
    %v87 = vld [vmem:[#allocation7 + $0x70] sm:$0xff]
    %v88 = vld [vmem:[#allocation7 + $0x78] sm:$0xff]
    %v89 = vld [vmem:[#allocation7 + $0x80] sm:$0xff]
    %v90 = vld [vmem:[#allocation7 + $0x88] sm:$0xff]
    %v91 = vld [vmem:[#allocation7 + $0x90] sm:$0xff]
    %v92 = vld [vmem:[#allocation7 + $0x98] sm:$0xff]
    %v93 = vld [vmem:[#allocation7 + $0xa0] sm:$0xff]
    %v94 = vld [vmem:[#allocation7 + $0xa8] sm:$0xff]
    %v95 = vld [vmem:[#allocation7 + $0xb0] sm:$0xff]
    %v96 = vld [vmem:[#allocation7 + $0xb8] sm:$0xff]
    %v97 = vld [vmem:[#allocation7 + $0xc0] sm:$0xff]
    %v98 = vld [vmem:[#allocation7 + $0xc8] sm:$0xff]
    %v99 = vld [vmem:[#allocation7 + $0xd0] sm:$0xff]
    %v100 = vld [vmem:[#allocation7 + $0xd8] sm:$0xff]
    %v101 = vld [vmem:[#allocation7 + $0xe0] sm:$0xff]
    %v102 = vld [vmem:[#allocation7 + $0xe8] sm:$0xff]
    %v103 = vld [vmem:[#allocation7 + $0xf0] sm:$0xff]
    %v104 = vld [vmem:[#allocation7 + $0xf8] sm:$0xff]
    %v105 = vld [vmem:[#allocation7 + $0x100] sm:$0xff]
    %v106 = vld [vmem:[#allocation7 + $0x108] sm:$0xff]
    %v107 = vld [vmem:[#allocation7 + $0x110] sm:$0xff]
    %v108 = vld [vmem:[#allocation7 + $0x118] sm:$0xff]
    %v109 = vld [vmem:[#allocation7 + $0x120] sm:$0xff]
    %v110 = vld [vmem:[#allocation7 + $0x128] sm:$0xff]
    %v111 = vld [vmem:[#allocation7 + $0x130] sm:$0xff]
    %v112 = vld [vmem:[#allocation7 + $0x138] sm:$0xff]
    %v113 = vld [vmem:[#allocation7 + $0x140] sm:$0xff]
    %v114 = vld [vmem:[#allocation7 + $0x148] sm:$0xff]
    %v115 = vld [vmem:[#allocation7 + $0x150] sm:$0xff]
    %v116 = vld [vmem:[#allocation7 + $0x158] sm:$0xff]
    %v117 = vld [vmem:[#allocation7 + $0x160] sm:$0xff]
    %v118 = vld [vmem:[#allocation7 + $0x168] sm:$0xff]
    %v119 = vld [vmem:[#allocation7 + $0x170] sm:$0xff]
    %v120 = vld [vmem:[#allocation7 + $0x178] sm:$0xff]
    %v121 = vld [vmem:[#allocation7 + $0x180] sm:$0xff]
    %v122 = vld [vmem:[#allocation7 + $0x188] sm:$0xff]
    %v123 = vld [vmem:[#allocation7 + $0x190] sm:$0xff]
    %v124 = vld [vmem:[#allocation7 + $0x198] sm:$0xff]
    %v125 = vld [vmem:[#allocation7 + $0x1a0] sm:$0xff]
    %v126 = vld [vmem:[#allocation7 + $0x1a8] sm:$0xff]
    %v127 = vld [vmem:[#allocation7 + $0x1b0] sm:$0xff]
    %v128 = vld [vmem:[#allocation7 + $0x1b8] sm:$0xff]
    %v129 = vld [vmem:[#allocation7 + $0x1c0] sm:$0xff]
    %v130 = vld [vmem:[#allocation7 + $0x1c8] sm:$0xff]
    %v131 = vld [vmem:[#allocation7 + $0x1d0] sm:$0xff]
    %v132 = vld [vmem:[#allocation7 + $0x1d8] sm:$0xff]
    %v133 = vld [vmem:[#allocation7 + $0x1e0] sm:$0xff]
    %v134 = vld [vmem:[#allocation7 + $0x1e8] sm:$0xff]
    %v135 = vld [vmem:[#allocation7 + $0x1f0] sm:$0xff]
    %v136 = vld [vmem:[#allocation7 + $0x1f8] sm:$0xff]
    %v137 = vld [vmem:[#allocation7 + $0x200] sm:$0xff]
    %v138 = vld [vmem:[#allocation7 + $0x208] sm:$0xff]
    %v139 = vld [vmem:[#allocation7 + $0x210] sm:$0xff]
    %v140 = vld [vmem:[#allocation7 + $0x218] sm:$0xff]
    %v141 = vld [vmem:[#allocation7 + $0x220] sm:$0xff]
    %v142 = vld [vmem:[#allocation7 + $0x228] sm:$0xff]
    %v143 = vld [vmem:[#allocation7 + $0x230] sm:$0xff]
    %v144 = vld [vmem:[#allocation7 + $0x238] sm:$0xff]
    %v145 = vld [vmem:[#allocation7 + $0x240] sm:$0xff]
    %v146 = vld [vmem:[#allocation7 + $0x248] sm:$0xff]
    %v147 = vld [vmem:[#allocation7 + $0x250] sm:$0xff]
    %v148 = vld [vmem:[#allocation7 + $0x258] sm:$0xff]
    %v149 = vld [vmem:[#allocation7 + $0x260] sm:$0xff]
    %v150 = vld [vmem:[#allocation7 + $0x268] sm:$0xff]
    %v151 = vld [vmem:[#allocation7 + $0x270] sm:$0xff]
    %v152 = vld [vmem:[#allocation7 + $0x278] sm:$0xff]
    %v153 = vld [vmem:[#allocation7 + $0x280] sm:$0xff]
    %v154 = vld [vmem:[#allocation7 + $0x288] sm:$0xff]
    %v155 = vld [vmem:[#allocation7 + $0x290] sm:$0xff]
    %v156 = vld [vmem:[#allocation7 + $0x298] sm:$0xff]
    %v157 = vld [vmem:[#allocation7 + $0x2a0] sm:$0xff]
    %v158 = vld [vmem:[#allocation7 + $0x2a8] sm:$0xff]
    %v159 = vld [vmem:[#allocation7 + $0x2b0] sm:$0xff]
    %v160 = vld [vmem:[#allocation7 + $0x2b8] sm:$0xff]
    %v161 = vld [vmem:[#allocation7 + $0x2c0] sm:$0xff]
    %v162 = vld [vmem:[#allocation7 + $0x2c8] sm:$0xff]
    %v163 = vld [vmem:[#allocation7 + $0x2d0] sm:$0xff]
    %v164 = vld [vmem:[#allocation7 + $0x2d8] sm:$0xff]
    %v165 = vld [vmem:[#allocation7 + $0x2e0] sm:$0xff]
    %v166 = vld [vmem:[#allocation7 + $0x2e8] sm:$0xff]
    %v167 = vld [vmem:[#allocation7 + $0x2f0] sm:$0xff]
    %v168 = vld [vmem:[#allocation7 + $0x2f8] sm:$0xff]
    %v169 = vld [vmem:[#allocation7 + $0x300] sm:$0xff]
    %v170 = vld [vmem:[#allocation7 + $0x308] sm:$0xff]
    %v171 = vld [vmem:[#allocation7 + $0x310] sm:$0xff]
    %v172 = vld [vmem:[#allocation7 + $0x318] sm:$0xff]
    %v173 = vld [vmem:[#allocation7 + $0x320] sm:$0xff]
    %v174 = vld [vmem:[#allocation7 + $0x328] sm:$0xff]
    %v175 = vld [vmem:[#allocation7 + $0x330] sm:$0xff]
    %v176 = vld [vmem:[#allocation7 + $0x338] sm:$0xff]
    %v177 = vld [vmem:[#allocation7 + $0x340] sm:$0xff]
    %v178 = vld [vmem:[#allocation7 + $0x348] sm:$0xff]
    %v179 = vld [vmem:[#allocation7 + $0x350] sm:$0xff]
    %v180 = vld [vmem:[#allocation7 + $0x358] sm:$0xff]
    %v181 = vld [vmem:[#allocation7 + $0x360] sm:$0xff]
    %v182 = vld [vmem:[#allocation7 + $0x368] sm:$0xff]
    %v183 = vld [vmem:[#allocation7 + $0x370] sm:$0xff]
    %v184 = vld [vmem:[#allocation7 + $0x378] sm:$0xff]
    %v185 = vld [vmem:[#allocation7 + $0x380] sm:$0xff]
    %v186 = vld [vmem:[#allocation7 + $0x388] sm:$0xff]
    %v187 = vld [vmem:[#allocation7 + $0x390] sm:$0xff]
    %v188 = vld [vmem:[#allocation7 + $0x398] sm:$0xff]
    %v189 = vld [vmem:[#allocation7 + $0x3a0] sm:$0xff]
    %v190 = vld [vmem:[#allocation7 + $0x3a8] sm:$0xff]
    %v191 = vld [vmem:[#allocation7 + $0x3b0] sm:$0xff]
    %v192 = vld [vmem:[#allocation7 + $0x3b8] sm:$0xff]
    %v193 = vld [vmem:[#allocation7 + $0x3c0] sm:$0xff]
    %v194 = vld [vmem:[#allocation7 + $0x3c8] sm:$0xff]
    %v195 = vld [vmem:[#allocation7 + $0x3d0] sm:$0xff]
    %v196 = vld [vmem:[#allocation7 + $0x3d8] sm:$0xff]
    %v197 = vld [vmem:[#allocation7 + $0x3e0] sm:$0xff]
    %v198 = vld [vmem:[#allocation7 + $0x3e8] sm:$0xff]
    %v199 = vld [vmem:[#allocation7 + $0x3f0] sm:$0xff]
    %v200 = vld [vmem:[#allocation7 + $0x3f8] sm:$0xff]
    %201 = vmatprep.subr.mxu0 %v74
    %202 = vmatpush1.msra.mxu0 %v73
    %203 = vmatprep.subr.mxu0 %v78
    %204 = vmatpush1.msra.mxu0 %v77
    %205 = vmatprep.subr.mxu0 %v82
    %206 = vmatpush1.msra.mxu0 %v81
    %207 = vmatprep.subr.mxu0 %v86
    %208 = vmatpush1.msra.mxu0 %v85
    %209 = vmatprep.subr.mxu0 %v90
    %210 = vmatpush1.msra.mxu0 %v89
    %211 = vmatprep.subr.mxu0 %v94
    %212 = vmatpush1.msra.mxu0 %v93
    %213 = vmatprep.subr.mxu0 %v98
    %214 = vmatpush1.msra.mxu0 %v97
    %215 = vmatprep.subr.mxu0 %v102
    %216 = vmatpush1.msra.mxu0 %v101
    %217 = vmatprep.subr.mxu0 %v106
    %218 = vmatpush1.msra.mxu0 %v105
    %219 = vmatprep.subr.mxu0 %v110
    %220 = vmatpush1.msra.mxu0 %v109
    %221 = vmatprep.subr.mxu0 %v114
    %222 = vmatpush1.msra.mxu0 %v113
    %223 = vmatprep.subr.mxu0 %v118
    %224 = vmatpush1.msra.mxu0 %v117
    %225 = vmatprep.subr.mxu0 %v122
    %226 = vmatpush1.msra.mxu0 %v121
    %227 = vmatprep.subr.mxu0 %v126
    %228 = vmatpush1.msra.mxu0 %v125
    %229 = vmatprep.subr.mxu0 %v130
    %230 = vmatpush1.msra.mxu0 %v129
    %231 = vmatprep.subr.mxu0 %v134
    %232 = vmatpush1.msra.mxu0 %v133
    %233 = vmatprep.subr.mxu0 %v138
    %234 = vmatpush1.msra.mxu0 %v137
    %235 = vmatprep.subr.mxu0 %v142
    %236 = vmatpush1.msra.mxu0 %v141
    %237 = vmatprep.subr.mxu0 %v146
    %238 = vmatpush1.msra.mxu0 %v145
    %239 = vmatprep.subr.mxu0 %v150
    %240 = vmatpush1.msra.mxu0 %v149
    %241 = vmatprep.subr.mxu0 %v154
    %242 = vmatpush1.msra.mxu0 %v153
    %243 = vmatprep.subr.mxu0 %v158
    %244 = vmatpush1.msra.mxu0 %v157
    %245 = vmatprep.subr.mxu0 %v162
    %246 = vmatpush1.msra.mxu0 %v161
    %247 = vmatprep.subr.mxu0 %v166
    %248 = vmatpush1.msra.mxu0 %v165
    %249 = vmatprep.subr.mxu0 %v170
    %250 = vmatpush1.msra.mxu0 %v169
    %251 = vmatprep.subr.mxu0 %v174
    %252 = vmatpush1.msra.mxu0 %v173
    %253 = vmatprep.subr.mxu0 %v178
    %254 = vmatpush1.msra.mxu0 %v177
    %255 = vmatprep.subr.mxu0 %v182
    %256 = vmatpush1.msra.mxu0 %v181
    %257 = vmatprep.subr.mxu0 %v186
    %258 = vmatpush1.msra.mxu0 %v185
    %259 = vmatprep.subr.mxu0 %v190
    %260 = vmatpush1.msra.mxu0 %v189
    %261 = vmatprep.subr.mxu0 %v194
    %262 = vmatpush1.msra.mxu0 %v193
    %263 = vmatprep.subr.mxu0 %v198
    %264 = vmatpush1.msra.mxu0 %v197
    %265 = vmatprep.mubr.f32.mxu0 %v60
    %266 = vmatmul.mubr.f32.gmra.mrb[0].mxu0 %v59
    %v267 = vpop.f32.mrb[0].mxu0
    %v268 = vadd.f32 0.0, %v267
    %v269 = vpop.f32.mrb[0].mxu0
    %v270 = vadd.f32 0.0, %v269
    %271 = vdwg.mxu0
    %272 = vmatprep.subr.mxu0 %v76
    %273 = vmatpush1.msra.mxu0 %v75
    %274 = vmatprep.subr.mxu0 %v80
    %275 = vmatpush1.msra.mxu0 %v79
    %276 = vmatprep.subr.mxu0 %v84
    %277 = vmatpush1.msra.mxu0 %v83
    %278 = vmatprep.subr.mxu0 %v88
    %279 = vmatpush1.msra.mxu0 %v87
    %280 = vmatprep.subr.mxu0 %v92
    %281 = vmatpush1.msra.mxu0 %v91
    %282 = vmatprep.subr.mxu0 %v96
    %283 = vmatpush1.msra.mxu0 %v95
    %284 = vmatprep.subr.mxu0 %v100
    %285 = vmatpush1.msra.mxu0 %v99
    %286 = vmatprep.subr.mxu0 %v104
    %287 = vmatpush1.msra.mxu0 %v103
    %288 = vmatprep.subr.mxu0 %v108
    %289 = vmatpush1.msra.mxu0 %v107
    %290 = vmatprep.subr.mxu0 %v112
    %291 = vmatpush1.msra.mxu0 %v111
    %292 = vmatprep.subr.mxu0 %v116
    %293 = vmatpush1.msra.mxu0 %v115
    %294 = vmatprep.subr.mxu0 %v120
    %295 = vmatpush1.msra.mxu0 %v119
    %296 = vmatprep.subr.mxu0 %v124
    %297 = vmatpush1.msra.mxu0 %v123
    %298 = vmatprep.subr.mxu0 %v128
    %299 = vmatpush1.msra.mxu0 %v127
    %300 = vmatprep.subr.mxu0 %v132
    %301 = vmatpush1.msra.mxu0 %v131
    %302 = vmatprep.subr.mxu0 %v136
    %303 = vmatpush1.msra.mxu0 %v135
    %304 = vmatprep.subr.mxu0 %v140
    %305 = vmatpush1.msra.mxu0 %v139
    %306 = vmatprep.subr.mxu0 %v144
    %307 = vmatpush1.msra.mxu0 %v143
    %308 = vmatprep.subr.mxu0 %v148
    %309 = vmatpush1.msra.mxu0 %v147
    %310 = vmatprep.subr.mxu0 %v152
    %311 = vmatpush1.msra.mxu0 %v151
    %312 = vmatprep.subr.mxu0 %v156
    %313 = vmatpush1.msra.mxu0 %v155
    %314 = vmatprep.subr.mxu0 %v160
    %315 = vmatpush1.msra.mxu0 %v159
    %316 = vmatprep.subr.mxu0 %v164
    %317 = vmatpush1.msra.mxu0 %v163
    %318 = vmatprep.subr.mxu0 %v168
    %319 = vmatpush1.msra.mxu0 %v167
    %320 = vmatprep.subr.mxu0 %v172
    %321 = vmatpush1.msra.mxu0 %v171
    %322 = vmatprep.subr.mxu0 %v176
    %323 = vmatpush1.msra.mxu0 %v175
    %324 = vmatprep.subr.mxu0 %v180
    %325 = vmatpush1.msra.mxu0 %v179
    %326 = vmatprep.subr.mxu0 %v184
    %327 = vmatpush1.msra.mxu0 %v183
    %328 = vmatprep.subr.mxu0 %v188
    %329 = vmatpush1.msra.mxu0 %v187
    %330 = vmatprep.subr.mxu0 %v192
    %331 = vmatpush1.msra.mxu0 %v191
    %332 = vmatprep.subr.mxu0 %v196
    %333 = vmatpush1.msra.mxu0 %v195
    %334 = vmatprep.subr.mxu0 %v200
    %335 = vmatpush1.msra.mxu0 %v199
    %336 = vmatprep.mubr.f32.mxu0 %v60
    %337 = vmatmul.mubr.f32.gmra.mrb[0].mxu0 %v59
    %v338 = vpop.f32.mrb[0].mxu0
    %v339 = vadd.f32 0.0, %v338
    %v340 = vpop.f32.mrb[0].mxu0
    %v341 = vadd.f32 0.0, %v340
    %342 = vdwg.mxu0
    %v343 = vmul.f32 %v268, %v268
    %v344 = vmul.f32 %v270, %v270
    %v345 = vmul.f32 %v339, %v339
    %v346 = vmul.f32 %v341, %v341
    %v347 = vadd.f32 %v343, %v345
    %v348 = vadd.f32 %v344, %v346
    %v349 = vrsqrt.pop %v347
    %v350 = vmul.f32 %v347, %v349
    %vm351 = vcmp.eq.f32.partialorder %v347, inf
    %v352 = vsel %vm351, %v347, %v350
    %vm353 = vcmp.eq.f32.partialorder %v347, 0.0
    %v354 = vand.u32 %v347, 2147483648
    %v355 = vsel %vm353, %v354, %v352
    %v356 = vrsqrt.pop %v348
    %v357 = vmul.f32 %v348, %v356
    %vm358 = vcmp.eq.f32.partialorder %v348, inf
    %v359 = vsel %vm358, %v348, %v357
    %vm360 = vcmp.eq.f32.partialorder %v348, 0.0
    %v361 = vand.u32 %v348, 2147483648
    %v362 = vsel %vm360, %v361, %v359
    %v363 = vadd.f32 %v355, %v362
    %364 = vadd.xlane.f32.xlu0 %v363
    %v365 = vpop.xlane.xlu0 %364
    %v366 = vrot.slane %v365, 4
    %v367 = vadd.f32 %v365, %v366
    %v368 = vrot.slane %v367, 2
    %v369 = vadd.f32 %v367, %v368
    %v370 = vrot.slane %v369, 1
    %v371 = vadd.f32 %v369, %v370
    %s372 = vtos %v371
    %v373 = vstv %s72
    %374 = vst [vmem:[#allocation8] sm:$0xff] %v373
    %v375 = vstv %s372
    %376 = vst [vmem:[#allocation9] sm:$0xff] %v375
    // Predicated region
    $region26: #{_lambda_.1} parent=1 // pred_check
      _
    $region27: #{_lambda_.1} parent=1 // pred_check_branch
      %378 = sbr.rel (0) target = $region29
    $region28: #{_lambda_.1} parent=1 // pred_region
      %s380 = ssub.s32 128, 128
      %381 = vsyncadd [#allocation4], %s380
      %s383 = sshll.u32 [#allocation8], 4
      %s384 = int_to_ptr.vmem [resolvable:$true] %s383
      %386 = dma.vmem_to_hbm [thread:$0]  %s384, 128, %s3, [#allocation4]
    $region29: #{_lambda_.1} parent=1 // pred_fallthru
      _
    // Predicated region
    $region30: #{_lambda_.1} parent=1 // pred_check
      _
    $region31: #{_lambda_.1} parent=1 // pred_check_branch
      %388 = sbr.rel (0) target = $region33
    $region32: #{_lambda_.1} parent=1 // pred_region
      %s390 = ssub.s32 128, 128
      %391 = vsyncadd [#allocation10], %s390
      %s393 = sshll.u32 [#allocation9], 4
      %s394 = int_to_ptr.vmem [resolvable:$true] %s393
      %396 = dma.vmem_to_hbm [thread:$0]  %s394, 128, %s4, [#allocation10]
    $region33: #{_lambda_.1} parent=1 // pred_fallthru
      _
    // Predicated region
    $region34: #{_lambda_.1} parent=1 // pred_check
      _
    $region35: #{_lambda_.1} parent=1 // pred_check_branch
      %398 = sbr.rel (0) target = $region37
    $region36: #{_lambda_.1} parent=1 // pred_region
      %399 = dma.done [#allocation4], 128
    $region37: #{_lambda_.1} parent=1 // pred_fallthru
      _
    // Predicated region
    $region38: #{_lambda_.1} parent=1 // pred_check
      _
    $region39: #{_lambda_.1} parent=1 // pred_check_branch
      %401 = sbr.rel (0) target = $region41
    $region40: #{_lambda_.1} parent=1 // pred_region
      %402 = dma.done [#allocation10], 128
    $region41: #{_lambda_.1} parent=1 // pred_fallthru
      _
    %403 = vsyncpa [#allocation3], 1
    %404 = vsyncpa [#allocation6], 1
    %405 = vsyncpa [#allocation4], 1
    %406 = vsyncpa [#allocation10], 1

</llo_original>
